<compile_context>
chip_gen: v6e
topology: v6e:2x2x1
jax: 0.10.0
libtpu: 0.0.40
codegen_flags: <defaults>
</compile_context>

<pallas_src>
import functools

import jax
import jax.numpy as jnp
from jax.experimental import pallas as pl
from jax.experimental.pallas import tpu as pltpu

BN_EPS = 1e-5
_INV_SQRT2 = 0.7071067811865476
_SQRT_2_OVER_PI = 0.7978845608028654


def _gelu(x, approximate):
    if approximate:
        # tanh approximation: runs on the EUP (otherwise-idle VLIW slot).
        return 0.5 * x * (1.0 + jnp.tanh(
            jnp.float32(_SQRT_2_OVER_PI) * (x + 0.044715 * x * x * x)))
    # PyTorch nn.GELU default: 0.5 * x * (1 + erf(x / sqrt(2)))
    return 0.5 * x * (1.0 + jax.lax.erf(x * jnp.float32(_INV_SQRT2)))


# --------------------------- pass 1: per-tile stats ---------------------------
def _stats_kernel(m_actual, tile_m, approximate,
                  patch_ref, w_ref, b_ref, sum_ref, sq_ref):
    # patch_ref: (tile_m, K) bf16   w_ref: (K, dim) bf16   b_ref: (1, dim) f32
    # sum_ref / sq_ref: (1, 1, dim) f32 per-tile partial statistics.
    i = pl.program_id(0)
    last = pl.num_programs(0) - 1

    conv = jnp.dot(patch_ref[...], w_ref[...],
                   preferred_element_type=jnp.float32) + b_ref[...]
    g = _gelu(conv, approximate)

    @pl.when(i < last)
    def _():
        sum_ref[...] = jnp.sum(g, axis=0, keepdims=True)[None]
        sq_ref[...] = jnp.sum(g * g, axis=0, keepdims=True)[None]

    @pl.when(i == last)
    def _():
        # Only the boundary tile may contain padded rows (which would otherwise
        # contribute gelu(bias) != 0 to the BatchNorm statistics).
        row = jax.lax.broadcasted_iota(jnp.int32, (tile_m, 1), 0) + i * tile_m
        gm = jnp.where(row < m_actual, g, 0.0)
        sum_ref[...] = jnp.sum(gm, axis=0, keepdims=True)[None]
        sq_ref[...] = jnp.sum(gm * gm, axis=0, keepdims=True)[None]


# -------------------- pass 2: recompute + fold BN into out --------------------
def _normalize_kernel(approximate,
                      patch_ref, w_ref, b_ref, scale_ref, shift_ref, out_ref):
    conv = jnp.dot(patch_ref[...], w_ref[...],
                   preferred_element_type=jnp.float32) + b_ref[...]
    g = _gelu(conv, approximate)
    out_ref[...] = (g * scale_ref[...] + shift_ref[...]).astype(out_ref.dtype)


# ------------------------------- tiling helpers -------------------------------
def _vmem_budget():
    """Returns (per-step tile budget bytes, vmem_limit cap bytes), generation aware."""
    cap_bytes = 64 * (1 << 20)  # conservative (v7x) fallback
    try:
        cap_bytes = int(pltpu.get_tpu_info().vmem_capacity_bytes)
    except Exception:
        pass
    if cap_bytes >= 100 * (1 << 20):            # v5e / v6e: 128 MiB VMEM
        return 48 * (1 << 20), 96 * (1 << 20)
    return 18 * (1 << 20), 48 * (1 << 20)       # v7x: 64 MiB -> leave headroom


def _pick_tile_m(m, stream_bytes, live_bytes, budget, min_tiles=2, max_tile=2048):
    """Row-tile: multiple of 8, fits `budget` (2x-buffered streams + f32
    intermediates), capped so the grid has >= min_tiles balanced tiles
    (v7x megacore) and at most max_tile rows."""
    m8 = -(-m // 8) * 8
    tile = budget // (2 * stream_bytes + live_bytes)
    tile = max(8, min(max_tile, (tile // 8) * 8))
    if m8 >= 16 * min_tiles:
        balanced = (-(-m // min_tiles) + 7) // 8 * 8
        tile = min(tile, balanced)
    return max(8, min(tile, m8))


def _vmem_limit(tile1, tile2, k, dim, cap):
    resident = 2 * (2 * k * dim) + 2 * 3 * 4 * dim          # weights + b/scale/shift
    p1 = 2 * (2 * tile1 * k) + 16 * tile1 * dim + 4 * 4 * dim
    p2 = 2 * (2 * tile2 * k) + 2 * (4 * tile2 * dim) + 12 * tile2 * dim
    need = resident + max(p1, p2) + (8 << 20)               # + compiler scratch headroom
    return int(min(cap, max(32 << 20, need)))


# ---------------------------------- wrapper ----------------------------------
@functools.partial(jax.jit, static_argnames=("patch_size", "approximate_gelu"))
def embedding_patch_forward(x, conv_w, conv_b, gamma, beta, *, patch_size,
                            approximate_gelu=False):
    """x: (N, 3, H, W) NCHW.  conv_w: (dim, 3, p, p).  conv_b/gamma/beta: (dim,)."""
    n, c, h, w = x.shape
    p = patch_size
    dim = conv_w.shape[0]
    assert c == 3 and h % p == 0 and w % p == 0
    hp, wp = h // p, w // p
    k = c * p * p
    m = n * hp * wp

    # --- glue: patch extraction (layout only); cast streamed operands to bf16.
    # (N,C,Hp,p,Wp,p) -> (N,Hp,Wp,C,p,p) -> (M, K)
    patches = x.reshape(n, c, hp, p, wp, p).transpose(0, 2, 4, 1, 3, 5)
    patches = patches.reshape(m, k).astype(jnp.bfloat16)
    w_mat = conv_w.reshape(dim, k).T.astype(jnp.bfloat16)     # (K, dim)
    b_row = conv_b.reshape(1, dim).astype(jnp.float32)

    # --- per-pass row tiling ---
    tile_budget, vmem_cap = _vmem_budget()
    tile1 = _pick_tile_m(m, stream_bytes=2 * k, live_bytes=16 * dim,
                         budget=tile_budget)
    tile2 = _pick_tile_m(m, stream_bytes=2 * k + 4 * dim, live_bytes=12 * dim,
                         budget=tile_budget)
    grid1 = -(-m // tile1)
    grid2 = -(-m // tile2)
    m_pad = max(grid1 * tile1, grid2 * tile2)
    if m_pad != m:
        patches = jnp.pad(patches, ((0, m_pad - m), (0, 0)))

    cparams = pltpu.CompilerParams(
        dimension_semantics=("parallel",),          # row tiles independent (megacore)
        vmem_limit_bytes=_vmem_limit(tile1, tile2, k, dim, vmem_cap),
    )

    # ------------- pass 1: bf16 matmul + GELU -> per-tile BN stats -------------
    cost1 = pl.CostEstimate(
        flops=2 * grid1 * tile1 * k * dim,
        transcendentals=grid1 * tile1 * dim,
        bytes_accessed=2 * grid1 * tile1 * k + 2 * k * dim + 4 * dim
                       + 2 * grid1 * dim * 4,
    )
    part_sum, part_sq = pl.pallas_call(
        functools.partial(_stats_kernel, m, tile1, approximate_gelu),
        grid=(grid1,),
        in_specs=[
            pl.BlockSpec((tile1, k), lambda i: (i, 0)),      # patch tile (bf16)
            pl.BlockSpec((k, dim), lambda i: (0, 0)),        # weights: resident
            pl.BlockSpec((1, dim), lambda i: (0, 0)),        # bias: resident
        ],
        out_specs=(
            pl.BlockSpec((1, 1, dim), lambda i: (i, 0, 0)),
            pl.BlockSpec((1, 1, dim), lambda i: (i, 0, 0)),
        ),
        out_shape=(
            jax.ShapeDtypeStruct((grid1, 1, dim), jnp.float32),
            jax.ShapeDtypeStruct((grid1, 1, dim), jnp.float32),
        ),
        compiler_params=cparams,
        cost_estimate=cost1,
    )(patches, w_mat, b_row)

    # ---- tiny combine in plain JAX: fold BN into per-channel scale / shift ----
    total_s = jnp.sum(part_sum.reshape(grid1, dim), axis=0)
    total_sq = jnp.sum(part_sq.reshape(grid1, dim), axis=0)
    mean = total_s / jnp.float32(m)
    var = jnp.maximum(total_sq / jnp.float32(m) - mean * mean, 0.0)  # biased var
    inv_std = jax.lax.rsqrt(var + jnp.float32(BN_EPS))
    gamma_f = gamma.astype(jnp.float32)
    beta_f = beta.astype(jnp.float32)
    scale = (gamma_f * inv_std).reshape(1, dim)
    shift = (beta_f - mean * gamma_f * inv_std).reshape(1, dim)

    # --------- pass 2: recompute matmul+GELU, apply scale/shift -> out ---------
    cost2 = pl.CostEstimate(
        flops=2 * grid2 * tile2 * k * dim + 2 * grid2 * tile2 * dim,
        transcendentals=grid2 * tile2 * dim,
        bytes_accessed=2 * grid2 * tile2 * k + 2 * k * dim + 3 * 4 * dim
                       + 4 * grid2 * tile2 * dim,
    )
    out = pl.pallas_call(
        functools.partial(_normalize_kernel, approximate_gelu),
        grid=(grid2,),
        in_specs=[
            pl.BlockSpec((tile2, k), lambda i: (i, 0)),      # patch tile (bf16)
            pl.BlockSpec((k, dim), lambda i: (0, 0)),        # weights: resident
            pl.BlockSpec((1, dim), lambda i: (0, 0)),        # bias: resident
            pl.BlockSpec((1, dim), lambda i: (0, 0)),        # scale: resident
            pl.BlockSpec((1, dim), lambda i: (0, 0)),        # shift: resident
        ],
        out_specs=pl.BlockSpec((tile2, dim), lambda i: (i, 0)),
        out_shape=jax.ShapeDtypeStruct((grid2 * tile2, dim), jnp.float32),
        compiler_params=cparams,
        cost_estimate=cost2,
    )(patches, w_mat, b_row, scale, shift)

    # (M, dim) -> (N, Hp, Wp, dim) -> NCHW (N, dim, Hp, Wp)
    return out[:m].reshape(n, hp, wp, dim).transpose(0, 3, 1, 2)


# --------------------------------- reference ---------------------------------
def _reference(x, conv_w, conv_b, gamma, beta, p, cast_bf16=False):
    if cast_bf16:
        x = x.astype(jnp.bfloat16).astype(jnp.float32)
        conv_w = conv_w.astype(jnp.bfloat16).astype(jnp.float32)
    conv = jax.lax.conv_general_dilated(
        x, conv_w, window_strides=(p, p), padding="VALID",
        dimension_numbers=("NCHW", "OIHW", "NCHW"),
        precision=jax.lax.Precision.HIGHEST)
    conv = conv + conv_b.reshape(1, -1, 1, 1)
    g = 0.5 * conv * (1.0 + jax.lax.erf(conv * _INV_SQRT2))
    mean = g.mean(axis=(0, 2, 3), keepdims=True)
    var = ((g - mean) ** 2).mean(axis=(0, 2, 3), keepdims=True)
    return ((g - mean) * jax.lax.rsqrt(var + BN_EPS)
            * gamma.reshape(1, -1, 1, 1) + beta.reshape(1, -1, 1, 1))


if __name__ == "__main__":
    # Small shapes: batch=2, in_channels=3 (fixed by the module), 16x16 images,
    # patch_size=4, dim=32  ->  output (2, 32, 4, 4).
    N, C, H, W = 2, 3, 16, 16
    PATCH = 4
    DIM = 32

    key = jax.random.PRNGKey(0)
    kx, kw, kb, kg, kbeta = jax.random.split(key, 5)

    x = jax.random.normal(kx, (N, C, H, W), dtype=jnp.float32)

    fan_in = C * PATCH * PATCH
    conv_w = jax.random.uniform(
        kw, (DIM, C, PATCH, PATCH), dtype=jnp.float32,
        minval=-1.0 / jnp.sqrt(fan_in), maxval=1.0 / jnp.sqrt(fan_in))
    conv_b = jax.random.uniform(
        kb, (DIM,), dtype=jnp.float32,
        minval=-1.0 / jnp.sqrt(fan_in), maxval=1.0 / jnp.sqrt(fan_in))
    gamma = 1.0 + 0.1 * jax.random.normal(kg, (DIM,), dtype=jnp.float32)
    beta = 0.1 * jax.random.normal(kbeta, (DIM,), dtype=jnp.float32)

    out = embedding_patch_forward(x, conv_w, conv_b, gamma, beta,
                                  patch_size=PATCH)
    out = jax.block_until_ready(out)
    assert out.shape == (N, DIM, H // PATCH, W // PATCH)

    # Check 1: same math with the same bf16 operand rounding (isolates kernel
    # correctness from the intentional bf16-stream quantization).
    ref_bf16 = jax.block_until_ready(
        _reference(x, conv_w, conv_b, gamma, beta, PATCH, cast_bf16=True))
    assert jnp.max(jnp.abs(out - ref_bf16)) < 5e-3, "mismatch vs bf16-operand reference"

    # Check 2: full-f32 PyTorch-equivalent math; the (looser) gap is purely the
    # bf16 rounding of the streamed operands requested by the perf review.
    ref_f32 = jax.block_until_ready(
        _reference(x, conv_w, conv_b, gamma, beta, PATCH, cast_bf16=False))
    assert jnp.max(jnp.abs(out - ref_f32)) < 1e-1, "mismatch vs f32 reference"

    print("KERNEL_OK")
</pallas_src>

<mosaic_0001>
module attributes {stable_mosaic.version = 11 : i64} {
  func.func @_stats_kernel(%arg0: i32, %arg1: memref<16x48xbf16, #tpu.memory_space<vmem>>, %arg2: memref<48x32xbf16, #tpu.memory_space<vmem>>, %arg3: memref<1x32xf32, #tpu.memory_space<vmem>>, %arg4: memref<1x1x32xf32, #tpu.memory_space<vmem>>, %arg5: memref<1x1x32xf32, #tpu.memory_space<vmem>>) attributes {dimension_semantics = [#tpu.dimension_semantics<parallel>], iteration_bounds = array<i64: 2>, scalar_prefetch = 0 : i64, scratch_operands = 0 : i64, tpu.core_type = #tpu.core_type<tc>, window_params = [{transform_indices = @transform_0, window_bounds = array<i64: 16, 48>}, {pipeline_mode = #tpu.pipeline_mode<synchronous>, transform_indices = @transform_1, window_bounds = array<i64: 48, 32>}, {pipeline_mode = #tpu.pipeline_mode<synchronous>, transform_indices = @transform_2, window_bounds = array<i64: 1, 32>}, {transform_indices = @transform_3, window_bounds = array<i64: 1, 1, 32>}, {transform_indices = @transform_4, window_bounds = array<i64: 1, 1, 32>}]} {
    %c0 = arith.constant 0 : index
    %c0_0 = arith.constant 0 : index
    %0 = vector.load %arg1[%c0, %c0_0] : memref<16x48xbf16, #tpu.memory_space<vmem>>, vector<16x48xbf16>
    %c0_1 = arith.constant 0 : index
    %c0_2 = arith.constant 0 : index
    %1 = vector.load %arg2[%c0_1, %c0_2] : memref<48x32xbf16, #tpu.memory_space<vmem>>, vector<48x32xbf16>
    %cst = arith.constant dense<0.000000e+00> : vector<16x32xf32>
    %2 = tpu.matmul %0, %1, %cst {dimension_numbers = #tpu.dot_dimension_numbers<[1], [0], [0], [1], [0, 0, 1, 1], [], []>} : vector<16x48xbf16>, vector<48x32xbf16>, vector<16x32xf32> -> vector<16x32xf32>
    %c0_3 = arith.constant 0 : index
    %c0_4 = arith.constant 0 : index
    %3 = vector.load %arg3[%c0_3, %c0_4] : memref<1x32xf32, #tpu.memory_space<vmem>>, vector<1x32xf32>
    %4 = vector.broadcast %3 : vector<1x32xf32> to vector<16x32xf32>
    %5 = arith.addf %2, %4 : vector<16x32xf32>
    %cst_5 = arith.constant 5.000000e-01 : f32
    %6 = vector.broadcast %cst_5 : f32 to vector<16x32xf32>
    %7 = arith.mulf %6, %5 : vector<16x32xf32>
    %cst_6 = arith.constant 0.707106769 : f32
    %8 = vector.broadcast %cst_6 : f32 to vector<16x32xf32>
    %9 = arith.mulf %5, %8 : vector<16x32xf32>
    %10 = math.erf %9 : vector<16x32xf32>
    %cst_7 = arith.constant 1.000000e+00 : f32
    %11 = vector.broadcast %cst_7 : f32 to vector<16x32xf32>
    %12 = arith.addf %11, %10 : vector<16x32xf32>
    %13 = arith.mulf %7, %12 : vector<16x32xf32>
    %c1_i32 = arith.constant 1 : i32
    %14 = arith.cmpi slt, %arg0, %c1_i32 : i32
    %15 = arith.extui %14 : i1 to i32
    %c0_i32 = arith.constant 0 : i32
    %16 = arith.cmpi ne, %15, %c0_i32 : i32
    scf.if %16 {
      %cst_10 = arith.constant dense<0.000000e+00> : vector<32xf32>
      %20 = vector.multi_reduction <add>, %13, %cst_10 [0] : vector<16x32xf32> to vector<32xf32>
      %21 = vector.shape_cast %20 : vector<32xf32> to vector<1x32xf32>
      %22 = vector.shape_cast %21 : vector<1x32xf32> to vector<1x1x32xf32>
      %c0_11 = arith.constant 0 : index
      %c0_12 = arith.constant 0 : index
      %c0_13 = arith.constant 0 : index
      %23 = vector.load %arg4[%c0_11, %c0_12, %c0_13] : memref<1x1x32xf32, #tpu.memory_space<vmem>>, vector<1x1x32xf32>
      tpu.vector_store %arg4[%c0_11, %c0_12, %c0_13], %22 {strides = array<i32>} : memref<1x1x32xf32, #tpu.memory_space<vmem>>, vector<1x1x32xf32>,
      %24 = arith.mulf %13, %13 : vector<16x32xf32>
      %cst_14 = arith.constant dense<0.000000e+00> : vector<32xf32>
      %25 = vector.multi_reduction <add>, %24, %cst_14 [0] : vector<16x32xf32> to vector<32xf32>
      %26 = vector.shape_cast %25 : vector<32xf32> to vector<1x32xf32>
      %27 = vector.shape_cast %26 : vector<1x32xf32> to vector<1x1x32xf32>
      %c0_15 = arith.constant 0 : index
      %c0_16 = arith.constant 0 : index
      %c0_17 = arith.constant 0 : index
      %28 = vector.load %arg5[%c0_15, %c0_16, %c0_17] : memref<1x1x32xf32, #tpu.memory_space<vmem>>, vector<1x1x32xf32>
      tpu.vector_store %arg5[%c0_15, %c0_16, %c0_17], %27 {strides = array<i32>} : memref<1x1x32xf32, #tpu.memory_space<vmem>>, vector<1x1x32xf32>,
    } else {
    }
    %c1_i32_8 = arith.constant 1 : i32
    %17 = arith.cmpi eq, %arg0, %c1_i32_8 : i32
    %18 = arith.extui %17 : i1 to i32
    %c0_i32_9 = arith.constant 0 : i32
    %19 = arith.cmpi ne, %18, %c0_i32_9 : i32
    scf.if %19 {
      %20 = tpu.iota {dimensions = array<i32: 0>} : vector<16x1xi32>
      %c16_i32 = arith.constant 16 : i32
      %21 = arith.muli %arg0, %c16_i32 : i32
      %22 = vector.broadcast %21 : i32 to vector<16x1xi32>
      %23 = arith.addi %20, %22 : vector<16x1xi32>
      %c32_i32 = arith.constant 32 : i32
      %24 = vector.broadcast %c32_i32 : i32 to vector<16x1xi32>
      %25 = arith.cmpi slt, %23, %24 : vector<16x1xi32>
      %cst_10 = arith.constant 0.000000e+00 : f32
      %26 = vector.shape_cast %25 : vector<16x1xi1> to vector<16x1xi1>
      %27 = vector.broadcast %26 : vector<16x1xi1> to vector<16x32xi1>
      %28 = vector.broadcast %cst_10 : f32 to vector<16x32xf32>
      %29 = arith.select %27, %13, %28 : vector<16x32xi1>, vector<16x32xf32>
      %cst_11 = arith.constant dense<0.000000e+00> : vector<32xf32>
      %30 = vector.multi_reduction <add>, %29, %cst_11 [0] : vector<16x32xf32> to vector<32xf32>
      %31 = vector.shape_cast %30 : vector<32xf32> to vector<1x32xf32>
      %32 = vector.shape_cast %31 : vector<1x32xf32> to vector<1x1x32xf32>
      %c0_12 = arith.constant 0 : index
      %c0_13 = arith.constant 0 : index
      %c0_14 = arith.constant 0 : index
      %33 = vector.load %arg4[%c0_12, %c0_13, %c0_14] : memref<1x1x32xf32, #tpu.memory_space<vmem>>, vector<1x1x32xf32>
      tpu.vector_store %arg4[%c0_12, %c0_13, %c0_14], %32 {strides = array<i32>} : memref<1x1x32xf32, #tpu.memory_space<vmem>>, vector<1x1x32xf32>,
      %34 = arith.mulf %29, %29 : vector<16x32xf32>
      %cst_15 = arith.constant dense<0.000000e+00> : vector<32xf32>
      %35 = vector.multi_reduction <add>, %34, %cst_15 [0] : vector<16x32xf32> to vector<32xf32>
      %36 = vector.shape_cast %35 : vector<32xf32> to vector<1x32xf32>
      %37 = vector.shape_cast %36 : vector<1x32xf32> to vector<1x1x32xf32>
      %c0_16 = arith.constant 0 : index
      %c0_17 = arith.constant 0 : index
      %c0_18 = arith.constant 0 : index
      %38 = vector.load %arg5[%c0_16, %c0_17, %c0_18] : memref<1x1x32xf32, #tpu.memory_space<vmem>>, vector<1x1x32xf32>
      tpu.vector_store %arg5[%c0_16, %c0_17, %c0_18], %37 {strides = array<i32>} : memref<1x1x32xf32, #tpu.memory_space<vmem>>, vector<1x1x32xf32>,
    } else {
    }
    return
  }
  func.func @transform_0(%arg0: i32) -> (i32, i32) {
    %c0_i32 = arith.constant 0 : i32
    %c0_i32_0 = arith.constant 0 : i32
    return %arg0, %c0_i32 : i32, i32
  }
  func.func @transform_1(%arg0: i32) -> (i32, i32) {
    %c0_i32 = arith.constant 0 : i32
    %c0_i32_0 = arith.constant 0 : i32
    %c0_i32_1 = arith.constant 0 : i32
    return %c0_i32, %c0_i32_0 : i32, i32
  }
  func.func @transform_2(%arg0: i32) -> (i32, i32) {
    %c0_i32 = arith.constant 0 : i32
    %c0_i32_0 = arith.constant 0 : i32
    %c0_i32_1 = arith.constant 0 : i32
    return %c0_i32, %c0_i32_0 : i32, i32
  }
  func.func @transform_3(%arg0: i32) -> (i32, i32, i32) {
    %c0_i32 = arith.constant 0 : i32
    %c0_i32_0 = arith.constant 0 : i32
    %c0_i32_1 = arith.constant 0 : i32
    return %arg0, %c0_i32, %c0_i32_0 : i32, i32, i32
  }
  func.func @transform_4(%arg0: i32) -> (i32, i32, i32) {
    %c0_i32 = arith.constant 0 : i32
    %c0_i32_0 = arith.constant 0 : i32
    %c0_i32_1 = arith.constant 0 : i32
    return %arg0, %c0_i32, %c0_i32_0 : i32, i32, i32
  }
}

module attributes {stable_mosaic.version = 11 : i64} {
  func.func @_normalize_kernel(%arg0: i32, %arg1: memref<16x48xbf16, #tpu.memory_space<vmem>>, %arg2: memref<48x32xbf16, #tpu.memory_space<vmem>>, %arg3: memref<1x32xf32, #tpu.memory_space<vmem>>, %arg4: memref<1x32xf32, #tpu.memory_space<vmem>>, %arg5: memref<1x32xf32, #tpu.memory_space<vmem>>, %arg6: memref<16x32xf32, #tpu.memory_space<vmem>>) attributes {dimension_semantics = [#tpu.dimension_semantics<parallel>], iteration_bounds = array<i64: 2>, scalar_prefetch = 0 : i64, scratch_operands = 0 : i64, tpu.core_type = #tpu.core_type<tc>, window_params = [{transform_indices = @transform_0, window_bounds = array<i64: 16, 48>}, {pipeline_mode = #tpu.pipeline_mode<synchronous>, transform_indices = @transform_1, window_bounds = array<i64: 48, 32>}, {pipeline_mode = #tpu.pipeline_mode<synchronous>, transform_indices = @transform_2, window_bounds = array<i64: 1, 32>}, {pipeline_mode = #tpu.pipeline_mode<synchronous>, transform_indices = @transform_3, window_bounds = array<i64: 1, 32>}, {pipeline_mode = #tpu.pipeline_mode<synchronous>, transform_indices = @transform_4, window_bounds = array<i64: 1, 32>}, {transform_indices = @transform_5, window_bounds = array<i64: 16, 32>}]} {
    %c0 = arith.constant 0 : index
    %c0_0 = arith.constant 0 : index
    %0 = vector.load %arg1[%c0, %c0_0] : memref<16x48xbf16, #tpu.memory_space<vmem>>, vector<16x48xbf16>
    %c0_1 = arith.constant 0 : index
    %c0_2 = arith.constant 0 : index
    %1 = vector.load %arg2[%c0_1, %c0_2] : memref<48x32xbf16, #tpu.memory_space<vmem>>, vector<48x32xbf16>
    %cst = arith.constant dense<0.000000e+00> : vector<16x32xf32>
    %2 = tpu.matmul %0, %1, %cst {dimension_numbers = #tpu.dot_dimension_numbers<[1], [0], [0], [1], [0, 0, 1, 1], [], []>} : vector<16x48xbf16>, vector<48x32xbf16>, vector<16x32xf32> -> vector<16x32xf32>
    %c0_3 = arith.constant 0 : index
    %c0_4 = arith.constant 0 : index
    %3 = vector.load %arg3[%c0_3, %c0_4] : memref<1x32xf32, #tpu.memory_space<vmem>>, vector<1x32xf32>
    %4 = vector.broadcast %3 : vector<1x32xf32> to vector<16x32xf32>
    %5 = arith.addf %2, %4 : vector<16x32xf32>
    %cst_5 = arith.constant 5.000000e-01 : f32
    %6 = vector.broadcast %cst_5 : f32 to vector<16x32xf32>
    %7 = arith.mulf %6, %5 : vector<16x32xf32>
    %cst_6 = arith.constant 0.707106769 : f32
    %8 = vector.broadcast %cst_6 : f32 to vector<16x32xf32>
    %9 = arith.mulf %5, %8 : vector<16x32xf32>
    %10 = math.erf %9 : vector<16x32xf32>
    %cst_7 = arith.constant 1.000000e+00 : f32
    %11 = vector.broadcast %cst_7 : f32 to vector<16x32xf32>
    %12 = arith.addf %11, %10 : vector<16x32xf32>
    %13 = arith.mulf %7, %12 : vector<16x32xf32>
    %c0_8 = arith.constant 0 : index
    %c0_9 = arith.constant 0 : index
    %14 = vector.load %arg4[%c0_8, %c0_9] : memref<1x32xf32, #tpu.memory_space<vmem>>, vector<1x32xf32>
    %15 = vector.broadcast %14 : vector<1x32xf32> to vector<16x32xf32>
    %16 = arith.mulf %13, %15 : vector<16x32xf32>
    %c0_10 = arith.constant 0 : index
    %c0_11 = arith.constant 0 : index
    %17 = vector.load %arg5[%c0_10, %c0_11] : memref<1x32xf32, #tpu.memory_space<vmem>>, vector<1x32xf32>
    %18 = vector.broadcast %17 : vector<1x32xf32> to vector<16x32xf32>
    %19 = arith.addf %16, %18 : vector<16x32xf32>
    %c0_12 = arith.constant 0 : index
    %c0_13 = arith.constant 0 : index
    %20 = vector.load %arg6[%c0_12, %c0_13] : memref<16x32xf32, #tpu.memory_space<vmem>>, vector<16x32xf32>
    tpu.vector_store %arg6[%c0_12, %c0_13], %19 {strides = array<i32>} : memref<16x32xf32, #tpu.memory_space<vmem>>, vector<16x32xf32>,
    return
  }
  func.func @transform_0(%arg0: i32) -> (i32, i32) {
    %c0_i32 = arith.constant 0 : i32
    %c0_i32_0 = arith.constant 0 : i32
    return %arg0, %c0_i32 : i32, i32
  }
  func.func @transform_1(%arg0: i32) -> (i32, i32) {
    %c0_i32 = arith.constant 0 : i32
    %c0_i32_0 = arith.constant 0 : i32
    %c0_i32_1 = arith.constant 0 : i32
    return %c0_i32, %c0_i32_0 : i32, i32
  }
  func.func @transform_2(%arg0: i32) -> (i32, i32) {
    %c0_i32 = arith.constant 0 : i32
    %c0_i32_0 = arith.constant 0 : i32
    %c0_i32_1 = arith.constant 0 : i32
    return %c0_i32, %c0_i32_0 : i32, i32
  }
  func.func @transform_3(%arg0: i32) -> (i32, i32) {
    %c0_i32 = arith.constant 0 : i32
    %c0_i32_0 = arith.constant 0 : i32
    %c0_i32_1 = arith.constant 0 : i32
    return %c0_i32, %c0_i32_0 : i32, i32
  }
  func.func @transform_4(%arg0: i32) -> (i32, i32) {
    %c0_i32 = arith.constant 0 : i32
    %c0_i32_0 = arith.constant 0 : i32
    %c0_i32_1 = arith.constant 0 : i32
    return %c0_i32, %c0_i32_0 : i32, i32
  }
  func.func @transform_5(%arg0: i32) -> (i32, i32) {
    %c0_i32 = arith.constant 0 : i32
    %c0_i32_0 = arith.constant 0 : i32
    return %arg0, %c0_i32 : i32, i32
  }
}

</mosaic_0001>

<llo_original>
// kernel: embedding_patch_forward.2
$region0: #{embedding_patch_forward.2}
  #allocation0 [shape = 'u32[]', space=smem, size = 0x4, offset = 0x4, fixed_abs, tag = 'smem constant byte address 0x4 - core index']
  #allocation1 [shape = 'u32[144,128]{1,0:T(1,128)}', space=vmem, size = 0x12000, scoped, tag = 'internal scratch']
  %s0 = inlined_call_operand.vmem [shape: bf16[32,48], index: 0, kind: input, shape index: {}]
  %s1 = inlined_call_operand.vmem [shape: bf16[48,32], index: 1, kind: input, shape index: {}]
  %s2 = inlined_call_operand.vmem [shape: f32[1,32], index: 2, kind: input, shape index: {}]
  %s3 = inlined_call_operand.vmem [shape: f32[2,1,32], index: 3, kind: output, shape index: {0}]
  %s4 = inlined_call_operand.vmem [shape: f32[2,1,32], index: 4, kind: output, shape index: {1}]
  %5 = xla_tuple %s3, %s4
  %s6 = sld [smem:[#allocation0]]
  $region61: #{embedding_patch_forward.2} parent=0
    _
  %s8 = ssub.s32 1, %s6
  %s9 = scalar_select 0, %s8, %s6
  loop: start=0, step=1, limit=4
  $region2: #{embedding_patch_forward.2} parent=0 // loop_pre_header
    _
  $region3: #{embedding_patch_forward.2} parent=0 // loop_header
    %s11 = sphi 0, %s15
    %p12 = scmp.ge.s32.totalorder %s11, 4
    %s21 = sphi 0, %s23
    %s24 = sphi 0, %s21
    %s25 = sphi 0, %s24
    %s41 = sphi 0, %s25
    %s45 = sphi 0, %s45
    %s47 = sphi 0, %s45
    %s48 = sphi 0, %s47
    %s62 = sphi 0, %s48
    %s66 = sphi 0, %s66
    %s68 = sphi 0, %s66
    %s69 = sphi 0, %s68
    %s83 = sphi 0, %s69
    %s89 = sphi 0, %s91
    %s92 = sphi 0, %s89
    %s93 = sphi 0, %s92
    %s109 = sphi 0, %s93
    %s115 = sphi 0, %s117
    %s118 = sphi 0, %s115
    %s119 = sphi 0, %s118
    %s135 = sphi 0, %s119
  $region4: #{embedding_patch_forward.2} parent=0 // loop_header_branch
    %14 = sbr.rel (%p12) target = $region8
  $region5: #{embedding_patch_forward.2} parent=0 // loop_body
    %s16 = ssub.s32 %s11, 1
    %s17 = ssub.s32 %s11, 2
    %s18 = sadd.s32 %s11, 1
    %s19 = ssub.s32 %s11, %s18
    %p20 = scmp.eq.s32.totalorder %s19, 0
    %s22 = sadd.s32 %s21, 1
    %s23 = scalar_select %p20, %s21, %s22
    %p26 = pneg %p20
    %p27 = scmp.eq.s32.totalorder %s11, 1
    %p28 = por %p26, %p27
    %p29 = scmp.ne.s32.totalorder %s21, %s24
    %p30 = scmp.eq.s32.totalorder %s11, 0
    %p31 = por %p29, %p30
    %p32 = scmp.ne.s32.totalorder %s21, %s24
    %p33 = scmp.eq.s32.totalorder %s16, 1
    %p34 = por %p32, %p33
    %p35 = scmp.ne.s32.totalorder %s24, %s25
    %p36 = scmp.eq.s32.totalorder %s16, 0
    %p37 = por %p35, %p36
    %p38 = scmp.ne.s32.totalorder %s24, %s25
    %p39 = scmp.eq.s32.totalorder %s17, 1
    %p40 = por %p38, %p39
    %p42 = scmp.ne.s32.totalorder %s25, %s41
    %p43 = scmp.eq.s32.totalorder %s17, 0
    %p44 = por %p42, %p43
    %s46 = sadd.s32 %s45, 1
    %p49 = scmp.eq.s32.totalorder %s11, 1
    %p50 = scmp.ne.s32.totalorder %s45, %s47
    %p51 = scmp.eq.s32.totalorder %s11, 0
    %p52 = por %p50, %p51
    %p53 = scmp.ne.s32.totalorder %s45, %s47
    %p54 = scmp.eq.s32.totalorder %s16, 1
    %p55 = por %p53, %p54
    %p56 = scmp.ne.s32.totalorder %s47, %s48
    %p57 = scmp.eq.s32.totalorder %s16, 0
    %p58 = por %p56, %p57
    %p59 = scmp.ne.s32.totalorder %s47, %s48
    %p60 = scmp.eq.s32.totalorder %s17, 1
    %p61 = por %p59, %p60
    %p63 = scmp.ne.s32.totalorder %s48, %s62
    %p64 = scmp.eq.s32.totalorder %s17, 0
    %p65 = por %p63, %p64
    %s67 = sadd.s32 %s66, 1
    %p70 = scmp.eq.s32.totalorder %s11, 1
    %p71 = scmp.ne.s32.totalorder %s66, %s68
    %p72 = scmp.eq.s32.totalorder %s11, 0
    %p73 = por %p71, %p72
    %p74 = scmp.ne.s32.totalorder %s66, %s68
    %p75 = scmp.eq.s32.totalorder %s16, 1
    %p76 = por %p74, %p75
    %p77 = scmp.ne.s32.totalorder %s68, %s69
    %p78 = scmp.eq.s32.totalorder %s16, 0
    %p79 = por %p77, %p78
    %p80 = scmp.ne.s32.totalorder %s68, %s69
    %p81 = scmp.eq.s32.totalorder %s17, 1
    %p82 = por %p80, %p81
    %p84 = scmp.ne.s32.totalorder %s69, %s83
    %p85 = scmp.eq.s32.totalorder %s17, 0
    %p86 = por %p84, %p85
    %s87 = ssub.s32 %s11, %s18
    %p88 = scmp.eq.s32.totalorder %s87, 0
    %s90 = sadd.s32 %s89, 1
    %s91 = scalar_select %p88, %s89, %s90
    %p94 = pneg %p88
    %p95 = scmp.eq.s32.totalorder %s11, 1
    %p96 = por %p94, %p95
    %p97 = scmp.ne.s32.totalorder %s89, %s92
    %p98 = scmp.eq.s32.totalorder %s11, 0
    %p99 = por %p97, %p98
    %p100 = scmp.ne.s32.totalorder %s89, %s92
    %p101 = scmp.eq.s32.totalorder %s16, 1
    %p102 = por %p100, %p101
    %p103 = scmp.ne.s32.totalorder %s92, %s93
    %p104 = scmp.eq.s32.totalorder %s16, 0
    %p105 = por %p103, %p104
    %p106 = scmp.ne.s32.totalorder %s92, %s93
    %p107 = scmp.eq.s32.totalorder %s17, 1
    %p108 = por %p106, %p107
    %p110 = scmp.ne.s32.totalorder %s93, %s109
    %p111 = scmp.eq.s32.totalorder %s17, 0
    %p112 = por %p110, %p111
    %s113 = ssub.s32 %s11, %s18
    %p114 = scmp.eq.s32.totalorder %s113, 0
    %s116 = sadd.s32 %s115, 1
    %s117 = scalar_select %p114, %s115, %s116
    %p120 = pneg %p114
    %p121 = scmp.eq.s32.totalorder %s11, 1
    %p122 = por %p120, %p121
    %p123 = scmp.ne.s32.totalorder %s115, %s118
    %p124 = scmp.eq.s32.totalorder %s11, 0
    %p125 = por %p123, %p124
    %p126 = scmp.ne.s32.totalorder %s115, %s118
    %p127 = scmp.eq.s32.totalorder %s16, 1
    %p128 = por %p126, %p127
    %p129 = scmp.ne.s32.totalorder %s118, %s119
    %p130 = scmp.eq.s32.totalorder %s16, 0
    %p131 = por %p129, %p130
    %p132 = scmp.ne.s32.totalorder %s118, %s119
    %p133 = scmp.eq.s32.totalorder %s17, 1
    %p134 = por %p132, %p133
    %p136 = scmp.ne.s32.totalorder %s119, %s135
    %p137 = scmp.eq.s32.totalorder %s17, 0
    %p138 = por %p136, %p137
    %p139 = scmp.le.s32.totalorder 1, %s11
    %p140 = scmp.lt.s32.totalorder %s11, 3
    %p141 = pnand %p139, %p140
    %p142 = pneg %p141
    // Predicated region
    $region9: #{embedding_patch_forward.2} parent=5 // pred_check
      _
    $region10: #{embedding_patch_forward.2} parent=5 // pred_check_branch
      %144 = sbr.rel (%p141) target = $region12
    $region11: #{embedding_patch_forward.2} parent=5 // pred_region
      %s145 = ssub.s32 %s11, 1
      // Predicated region
      $region13: #{embedding_patch_forward.2} parent=11 // pred_check
        %p146 = pneg %p58
      $region14: #{embedding_patch_forward.2} parent=11 // pred_check_branch
        %148 = sbr.rel (%p146) target = $region16
      $region15: #{embedding_patch_forward.2} parent=11 // pred_region
        _
      $region16: #{embedding_patch_forward.2} parent=11 // pred_fallthru
        _
      // Predicated region
      $region17: #{embedding_patch_forward.2} parent=11 // pred_check
        %p149 = pneg %p79
      $region18: #{embedding_patch_forward.2} parent=11 // pred_check_branch
        %151 = sbr.rel (%p149) target = $region20
      $region19: #{embedding_patch_forward.2} parent=11 // pred_region
        _
      $region20: #{embedding_patch_forward.2} parent=11 // pred_fallthru
        _
    $region12: #{embedding_patch_forward.2} parent=5 // pred_fallthru
      _
    %p152 = scmp.lt.s32.totalorder %s11, 2
    // Predicated region
    $region21: #{embedding_patch_forward.2} parent=5 // pred_check
      %p153 = pneg %p152
    $region22: #{embedding_patch_forward.2} parent=5 // pred_check_branch
      %155 = sbr.rel (%p153) target = $region24
    $region23: #{embedding_patch_forward.2} parent=5 // pred_region
      // Predicated region
      $region25: #{embedding_patch_forward.2} parent=23 // pred_check
        %p156 = pneg %p31
      $region26: #{embedding_patch_forward.2} parent=23 // pred_check_branch
        %158 = sbr.rel (%p156) target = $region28
      $region27: #{embedding_patch_forward.2} parent=23 // pred_region
        %s159 = smul.u32 2, %s11
        %p160 = scmp.lt.s32.totalorder %s159, 3
        %s161 = scalar_select %p160, %s159, 3
        %s162 = smul.addr %s161, 4
        %s163 = scalar_lea.vmem %s0, %s162
        %s164 = smul.u32 2, %s11
      $region28: #{embedding_patch_forward.2} parent=23 // pred_fallthru
        _
    $region24: #{embedding_patch_forward.2} parent=5 // pred_fallthru
      _
    %p165 = scmp.le.s32.totalorder 1, %s11
    %p166 = scmp.lt.s32.totalorder %s11, 3
    %p167 = pnand %p165, %p166
    %p168 = pneg %p167
    // Predicated region
    $region29: #{embedding_patch_forward.2} parent=5 // pred_check
      _
    $region30: #{embedding_patch_forward.2} parent=5 // pred_check_branch
      %170 = sbr.rel (%p167) target = $region32
    $region31: #{embedding_patch_forward.2} parent=5 // pred_region
      %s171 = ssub.s32 %s11, 1
      %s172 = smul.u32 2, %s16
      %p173 = scmp.lt.s32.totalorder %s172, 3
      %s174 = scalar_select %p173, %s172, 3
      %s175 = smul.addr %s174, 4
      %s176 = scalar_lea.vmem %s0, %s175
      %p177 = pneg %p37
      %p178 = pneg %p34
      %p179 = pneg %p58
      %p180 = pneg %p55
      %p181 = pneg %p79
      %p182 = pneg %p76
      %p183 = pneg %p105
      %p184 = pneg %p102
      %p185 = scmp.lt.s32.totalorder %s16, 1
      %s186 = scalar_select %p185, %s16, 1
      %s187 = scalar_lea.vmem %s3, %s186
      %p188 = pneg %p131
      %p189 = pneg %p128
      %p190 = scmp.lt.s32.totalorder %s16, 1
      %s191 = scalar_select %p190, %s16, 1
      %s192 = scalar_lea.vmem %s4, %s191
      %s193 = smul.u32 2, %s16
      %p194 = scmp.lt.s32.totalorder %s193, 3
      %s195 = scalar_select %p194, %s193, 3
      %s196 = smul.addr %s195, 4
      %s197 = scalar_lea.vmem %s0, %s196
      %s198 = smul.u32 2, %s16
      %p199 = scmp.lt.s32.totalorder %s16, 1
      %s200 = scalar_select %p199, %s16, 1
      %s201 = scalar_lea.vmem %s3, %s200
      %p202 = scmp.lt.s32.totalorder %s16, 1
      %s203 = scalar_select %p202, %s16, 1
      %s204 = scalar_lea.vmem %s4, %s203
      %v206 = vld [vmem:[%s197] sm:$0xf]
      %v207 = vld [vmem:[%s197 + $0x4] sm:$0xf]
      %v208 = vld [vmem:[%s1] sm:$0xf]
      %v209 = vld [vmem:[%s1 + $0x4] sm:$0xf]
      %v210 = vld [vmem:[%s1 + $0x8] sm:$0xf]
      %v211 = vld [vmem:[%s1 + $0xc] sm:$0xf]
      %v212 = vld [vmem:[%s1 + $0x10] sm:$0xf]
      %v213 = vld [vmem:[%s1 + $0x14] sm:$0xf]
      %v214 = vld [vmem:[%s2] sm:$0x1]
      %v216 = vlaneseq
      %v217 = vshrl.u32 %v216, 7
      %v218 = vsub.s32 0, %v217
      %v219 = vrot.slane %v214, %v218
      %v223 = vunpack.c.l.b16 %v206
      %v224 = vunpack.c.l.b16 %v207
      %v225 = vpack.c.b16 %v224, %v223
      %v232 = vunpack.c.l.b16 %v208
      %v233 = vunpack.c.l.b16 %v209
      %v234 = vunpack.c.l.b16 %v210
      %v235 = vunpack.c.l.b16 %v211
      %v236 = vunpack.c.l.b16 %v212
      %v237 = vunpack.c.l.b16 %v213
      %v238 = vpack.c.b16 %v233, %v232
      %v239 = vpack.c.b16 %v235, %v234
      %v240 = vpack.c.b16 %v237, %v236
      %vm244 = vcmask 392192
      %v246 = vsel %vm244, %v225, 0
      %248 = vmatprep.subr.bf16.mxu0 0
      %249 = vmatpush1.bf16.msra.mxu0 0
      %250 = vmatprep.subr.bf16.mxu0 0
      %251 = vmatpush1.bf16.msra.mxu0 0
      %252 = vmatprep.subr.bf16.mxu0 0
      %253 = vmatpush1.bf16.msra.mxu0 0
      %254 = vmatprep.subr.bf16.mxu0 0
      %255 = vmatpush1.bf16.msra.mxu0 0
      %256 = vmatprep.subr.bf16.mxu0 0
      %257 = vmatpush1.bf16.msra.mxu0 0
      %258 = vmatprep.subr.bf16.mxu0 0
      %259 = vmatpush1.bf16.msra.mxu0 %v240
      %260 = vmatprep.subr.bf16.mxu0 0
      %261 = vmatpush1.bf16.msra.mxu0 %v239
      %262 = vmatprep.subr.bf16.mxu0 0
      %263 = vmatpush1.bf16.msra.mxu0 %v238
      %264 = vmatprep.subr.bf16.mxu0 0
      %265 = vmatpush2.bf16.msra.mxu0 0
      %266 = vmatprep.subr.bf16.mxu0 0
      %267 = vmatpush2.bf16.msra.mxu0 0
      %268 = vmatprep.subr.bf16.mxu0 0
      %269 = vmatpush2.bf16.msra.mxu0 0
      %270 = vmatprep.subr.bf16.mxu0 0
      %271 = vmatpush2.bf16.msra.mxu0 0
      %272 = vmatprep.subr.bf16.mxu0 0
      %273 = vmatpush2.bf16.msra.mxu0 0
      %274 = vmatprep.subr.bf16.mxu0 0
      %275 = vmatpush2.bf16.msra.mxu0 0
      %276 = vmatprep.subr.bf16.mxu0 0
      %277 = vmatpush2.bf16.msra.mxu0 0
      %278 = vmatprep.subr.bf16.mxu0 0
      %279 = vmatpush2.bf16.msra.mxu0 0
      %280 = vmatprep.mubr.bf16.mxu0 0
      %281 = vmatmul.mubr.bf16.gmra.mxu0 %v246
      %v282 = vpop.f32.mrf.mxu0
      %v283 = vadd.f32 %v219, %v282
      %v284 = vpop.f32.mrf.mxu0
      %v285 = vpop.f32.mrf.mxu0
      %v286 = vadd.f32 %v219, %v285
      %v287 = vpop.f32.mrf.mxu0
      %288 = vdwg.mxu0
      %v289 = vmul.f32 %v283, 0.5
      %v290 = vmul.f32 %v286, 0.5
      %v291 = vmul.f32 %v283, 0.70710677
      %v292 = vmul.f32 %v286, 0.70710677
      %v293 = verf.f32.pop %v291
      %v294 = verf.f32.pop %v292
      %v295 = vadd.f32 %v293, 1.0
      %v296 = vadd.f32 %v294, 1.0
      %v297 = vmul.f32 %v289, %v295
      %v298 = vmul.f32 %v290, %v296
      %p299 = scmp.lt.s32.totalorder %s16, 1
      // Predicated region
      $region33: #{embedding_patch_forward.2} parent=31 // pred_check
        %p300 = pneg %p299
      $region34: #{embedding_patch_forward.2} parent=31 // pred_check_branch
        %302 = sbr.rel (%p300) target = $region36
      $region35: #{embedding_patch_forward.2} parent=31 // pred_region
        %vm303 = vcmask 261120
        %v304 = vsel %vm303, %v297, 0.0
        %v305 = vsel %vm303, %v298, 0.0
        %v306 = vadd.f32 %v304, %v305
        %v307 = vrot.slane %v306, 4
        %v308 = vadd.f32 %v306, %v307
        %v309 = vrot.slane %v308, 2
        %v310 = vadd.f32 %v308, %v309
        %v311 = vrot.slane %v310, 1
        %v312 = vadd.f32 %v310, %v311
        %vm313 = vcmask 253952
        %314 = vst.msk [vmem:[%s201] sm:$0x1] %vm313, %v312
        %v315 = vmul.f32 %v297, %v297
        %v316 = vmul.f32 %v298, %v298
        %v317 = vsel %vm303, %v315, 0.0
        %v318 = vsel %vm303, %v316, 0.0
        %v319 = vadd.f32 %v317, %v318
        %v320 = vrot.slane %v319, 4
        %v321 = vadd.f32 %v319, %v320
        %v322 = vrot.slane %v321, 2
        %v323 = vadd.f32 %v321, %v322
        %v324 = vrot.slane %v323, 1
        %v325 = vadd.f32 %v323, %v324
        %326 = vst.msk [vmem:[%s204] sm:$0x1] %vm313, %v325
      $region36: #{embedding_patch_forward.2} parent=31 // pred_fallthru
        _
      %p327 = scmp.eq.s32.totalorder %s16, 1
      // Predicated region
      $region37: #{embedding_patch_forward.2} parent=31 // pred_check
        %p328 = pneg %p327
      $region38: #{embedding_patch_forward.2} parent=31 // pred_check_branch
        %330 = sbr.rel (%p328) target = $region40
      $region39: #{embedding_patch_forward.2} parent=31 // pred_region
        %v331 = vlaneseq
        %v332 = vshrl.u32 %v331, 7
        %v333 = vadd.s32 %v332, 8
        %s334 = smul.u32 %s16, 16
        %v335 = vstv %s334
        %v336 = vadd.s32 %v332, %v335
        %v337 = vadd.s32 %v333, %v335
        %vm338 = vcmp.lt.s32.totalorder %v336, 32
        %vm339 = vcmp.lt.s32.totalorder %v337, 32
        %v340 = vsel %vm338, 1, 0
        %v341 = vsel %vm339, 1, 0
        %vm342 = vcmp.eq.s32.totalorder %v340, 1
        %vm343 = vcmp.eq.s32.totalorder %v341, 1
        %v344 = vsel %vm342, %v297, 0.0
        %v345 = vsel %vm343, %v298, 0.0
        %vm346 = vcmask 261120
        %v347 = vsel %vm346, %v344, 0.0
        %v348 = vsel %vm346, %v345, 0.0
        %v349 = vadd.f32 %v347, %v348
        %v350 = vrot.slane %v349, 4
        %v351 = vadd.f32 %v349, %v350
        %v352 = vrot.slane %v351, 2
        %v353 = vadd.f32 %v351, %v352
        %v354 = vrot.slane %v353, 1
        %v355 = vadd.f32 %v353, %v354
        %vm356 = vcmask 253952
        %357 = vst.msk [vmem:[%s201] sm:$0x1] %vm356, %v355
        %v358 = vmul.f32 %v344, %v344
        %v359 = vmul.f32 %v345, %v345
        %v360 = vsel %vm346, %v358, 0.0
        %v361 = vsel %vm346, %v359, 0.0
        %v362 = vadd.f32 %v360, %v361
        %v363 = vrot.slane %v362, 4
        %v364 = vadd.f32 %v362, %v363
        %v365 = vrot.slane %v364, 2
        %v366 = vadd.f32 %v364, %v365
        %v367 = vrot.slane %v366, 1
        %v368 = vadd.f32 %v366, %v367
        %369 = vst.msk [vmem:[%s204] sm:$0x1] %vm356, %v368
      $region40: #{embedding_patch_forward.2} parent=31 // pred_fallthru
        _
      %p370 = scmp.lt.s32.totalorder %s16, 1
      %s371 = scalar_select %p370, %s16, 1
      %s372 = scalar_lea.vmem %s3, %s371
      %p373 = scmp.lt.s32.totalorder %s16, 1
      %s374 = scalar_select %p373, %s16, 1
      %s375 = scalar_lea.vmem %s4, %s374
      // Predicated region
      $region41: #{embedding_patch_forward.2} parent=31 // pred_check
        %p376 = pneg %p102
      $region42: #{embedding_patch_forward.2} parent=31 // pred_check_branch
        %378 = sbr.rel (%p376) target = $region44
      $region43: #{embedding_patch_forward.2} parent=31 // pred_region
        _
      $region44: #{embedding_patch_forward.2} parent=31 // pred_fallthru
        _
      // Predicated region
      $region45: #{embedding_patch_forward.2} parent=31 // pred_check
        %p379 = pneg %p128
      $region46: #{embedding_patch_forward.2} parent=31 // pred_check_branch
        %381 = sbr.rel (%p379) target = $region48
      $region47: #{embedding_patch_forward.2} parent=31 // pred_region
        _
      $region48: #{embedding_patch_forward.2} parent=31 // pred_fallthru
        _
    $region32: #{embedding_patch_forward.2} parent=5 // pred_fallthru
      _
    %p382 = scmp.le.s32.totalorder 2, %s11
    // Predicated region
    $region49: #{embedding_patch_forward.2} parent=5 // pred_check
      %p383 = pneg %p382
    $region50: #{embedding_patch_forward.2} parent=5 // pred_check_branch
      %385 = sbr.rel (%p383) target = $region52
    $region51: #{embedding_patch_forward.2} parent=5 // pred_region
      %s386 = ssub.s32 %s11, 2
      // Predicated region
      $region53: #{embedding_patch_forward.2} parent=51 // pred_check
        %p387 = pneg %p108
      $region54: #{embedding_patch_forward.2} parent=51 // pred_check_branch
        %389 = sbr.rel (%p387) target = $region56
      $region55: #{embedding_patch_forward.2} parent=51 // pred_region
        %p390 = scmp.lt.s32.totalorder %s17, 1
        %s391 = scalar_select %p390, %s17, 1
        %s392 = scalar_lea.vmem %s3, %s391
      $region56: #{embedding_patch_forward.2} parent=51 // pred_fallthru
        _
      // Predicated region
      $region57: #{embedding_patch_forward.2} parent=51 // pred_check
        %p393 = pneg %p134
      $region58: #{embedding_patch_forward.2} parent=51 // pred_check_branch
        %395 = sbr.rel (%p393) target = $region60
      $region59: #{embedding_patch_forward.2} parent=51 // pred_region
        %p396 = scmp.lt.s32.totalorder %s17, 1
        %s397 = scalar_select %p396, %s17, 1
        %s398 = scalar_lea.vmem %s4, %s397
      $region60: #{embedding_patch_forward.2} parent=51 // pred_fallthru
        _
    $region52: #{embedding_patch_forward.2} parent=5 // pred_fallthru
      _
  $region6: #{embedding_patch_forward.2} parent=0 // loop_footer
    %s15 = sadd.s32 1, %s11
  $region7: #{embedding_patch_forward.2} parent=0 // loop_footer_branch
    %10 = sbr.rel target = $region3
  $region8: #{embedding_patch_forward.2} parent=0 // loop_exit
    _

// kernel: embedding_patch_forward.3
$region0: #{embedding_patch_forward.3}
  #allocation0 [shape = 'u32[]', space=smem, size = 0x4, offset = 0x4, fixed_abs, tag = 'smem constant byte address 0x4 - core index']
  #allocation1 [shape = 'u32[144,128]{1,0:T(1,128)}', space=vmem, size = 0x12000, scoped, tag = 'internal scratch']
  %s0 = inlined_call_operand.vmem [shape: bf16[32,48], index: 0, kind: input, shape index: {}]
  %s1 = inlined_call_operand.vmem [shape: bf16[48,32], index: 1, kind: input, shape index: {}]
  %s2 = inlined_call_operand.vmem [shape: f32[1,32], index: 2, kind: input, shape index: {}]
  %s3 = inlined_call_operand.vmem [shape: f32[1,32], index: 3, kind: input, shape index: {}]
  %s4 = inlined_call_operand.vmem [shape: f32[1,32], index: 4, kind: input, shape index: {}]
  %s5 = inlined_call_operand.hbm [shape: f32[32,32], index: 5, kind: output, shape index: {}]
  %s6 = sld [smem:[#allocation0]]
  $region53: #{embedding_patch_forward.3} parent=0
    _
  %s8 = ssub.s32 1, %s6
  %s9 = scalar_select 0, %s8, %s6
  $region1: #{embedding_patch_forward.3} parent=0
    #allocation2 [shape = 'u8[16384]{0}', space=vmem, size = 0x4000, scoped, tag = 'output window, operand 0']
    #allocation3 [shape = 's32[2]{0}', space=sflag, size = 0x8, scoped, tag = 'scoped memory for embedding_patch_forward.3']
    %10 = vsyncpa [#allocation3], 0
    %s11 = scalar_lea.sflag [#allocation3], 1
    %12 = vsyncpa %s11, 0
    loop: start=0, step=1, limit=4
    $region2: #{embedding_patch_forward.3} parent=1 // loop_pre_header
      _
    $region3: #{embedding_patch_forward.3} parent=1 // loop_header
      %s14 = sphi 0, %s18
      %p15 = scmp.ge.s32.totalorder %s14, 4
      %s24 = sphi 0, %s26
      %s27 = sphi 0, %s24
      %s28 = sphi 0, %s27
      %s44 = sphi 0, %s28
      %s48 = sphi 0, %s48
      %s50 = sphi 0, %s48
      %s51 = sphi 0, %s50
      %s65 = sphi 0, %s51
      %s69 = sphi 0, %s69
      %s71 = sphi 0, %s69
      %s72 = sphi 0, %s71
      %s86 = sphi 0, %s72
      %s90 = sphi 0, %s90
      %s92 = sphi 0, %s90
      %s93 = sphi 0, %s92
      %s107 = sphi 0, %s93
      %s111 = sphi 0, %s111
      %s113 = sphi 0, %s111
      %s114 = sphi 0, %s113
      %s128 = sphi 0, %s114
      %s134 = sphi 0, %s136
      %s137 = sphi 0, %s134
      %s138 = sphi 0, %s137
      %s154 = sphi 0, %s138
    $region4: #{embedding_patch_forward.3} parent=1 // loop_header_branch
      %17 = sbr.rel (%p15) target = $region8
    $region5: #{embedding_patch_forward.3} parent=1 // loop_body
      %s19 = ssub.s32 %s14, 1
      %s20 = ssub.s32 %s14, 2
      %s21 = sadd.s32 %s14, 1
      %s22 = ssub.s32 %s14, %s21
      %p23 = scmp.eq.s32.totalorder %s22, 0
      %s25 = sadd.s32 %s24, 1
      %s26 = scalar_select %p23, %s24, %s25
      %p29 = pneg %p23
      %p30 = scmp.eq.s32.totalorder %s14, 1
      %p31 = por %p29, %p30
      %p32 = scmp.ne.s32.totalorder %s24, %s27
      %p33 = scmp.eq.s32.totalorder %s14, 0
      %p34 = por %p32, %p33
      %p35 = scmp.ne.s32.totalorder %s24, %s27
      %p36 = scmp.eq.s32.totalorder %s19, 1
      %p37 = por %p35, %p36
      %p38 = scmp.ne.s32.totalorder %s27, %s28
      %p39 = scmp.eq.s32.totalorder %s19, 0
      %p40 = por %p38, %p39
      %p41 = scmp.ne.s32.totalorder %s27, %s28
      %p42 = scmp.eq.s32.totalorder %s20, 1
      %p43 = por %p41, %p42
      %p45 = scmp.ne.s32.totalorder %s28, %s44
      %p46 = scmp.eq.s32.totalorder %s20, 0
      %p47 = por %p45, %p46
      %s49 = sadd.s32 %s48, 1
      %p52 = scmp.eq.s32.totalorder %s14, 1
      %p53 = scmp.ne.s32.totalorder %s48, %s50
      %p54 = scmp.eq.s32.totalorder %s14, 0
      %p55 = por %p53, %p54
      %p56 = scmp.ne.s32.totalorder %s48, %s50
      %p57 = scmp.eq.s32.totalorder %s19, 1
      %p58 = por %p56, %p57
      %p59 = scmp.ne.s32.totalorder %s50, %s51
      %p60 = scmp.eq.s32.totalorder %s19, 0
      %p61 = por %p59, %p60
      %p62 = scmp.ne.s32.totalorder %s50, %s51
      %p63 = scmp.eq.s32.totalorder %s20, 1
      %p64 = por %p62, %p63
      %p66 = scmp.ne.s32.totalorder %s51, %s65
      %p67 = scmp.eq.s32.totalorder %s20, 0
      %p68 = por %p66, %p67
      %s70 = sadd.s32 %s69, 1
      %p73 = scmp.eq.s32.totalorder %s14, 1
      %p74 = scmp.ne.s32.totalorder %s69, %s71
      %p75 = scmp.eq.s32.totalorder %s14, 0
      %p76 = por %p74, %p75
      %p77 = scmp.ne.s32.totalorder %s69, %s71
      %p78 = scmp.eq.s32.totalorder %s19, 1
      %p79 = por %p77, %p78
      %p80 = scmp.ne.s32.totalorder %s71, %s72
      %p81 = scmp.eq.s32.totalorder %s19, 0
      %p82 = por %p80, %p81
      %p83 = scmp.ne.s32.totalorder %s71, %s72
      %p84 = scmp.eq.s32.totalorder %s20, 1
      %p85 = por %p83, %p84
      %p87 = scmp.ne.s32.totalorder %s72, %s86
      %p88 = scmp.eq.s32.totalorder %s20, 0
      %p89 = por %p87, %p88
      %s91 = sadd.s32 %s90, 1
      %p94 = scmp.eq.s32.totalorder %s14, 1
      %p95 = scmp.ne.s32.totalorder %s90, %s92
      %p96 = scmp.eq.s32.totalorder %s14, 0
      %p97 = por %p95, %p96
      %p98 = scmp.ne.s32.totalorder %s90, %s92
      %p99 = scmp.eq.s32.totalorder %s19, 1
      %p100 = por %p98, %p99
      %p101 = scmp.ne.s32.totalorder %s92, %s93
      %p102 = scmp.eq.s32.totalorder %s19, 0
      %p103 = por %p101, %p102
      %p104 = scmp.ne.s32.totalorder %s92, %s93
      %p105 = scmp.eq.s32.totalorder %s20, 1
      %p106 = por %p104, %p105
      %p108 = scmp.ne.s32.totalorder %s93, %s107
      %p109 = scmp.eq.s32.totalorder %s20, 0
      %p110 = por %p108, %p109
      %s112 = sadd.s32 %s111, 1
      %p115 = scmp.eq.s32.totalorder %s14, 1
      %p116 = scmp.ne.s32.totalorder %s111, %s113
      %p117 = scmp.eq.s32.totalorder %s14, 0
      %p118 = por %p116, %p117
      %p119 = scmp.ne.s32.totalorder %s111, %s113
      %p120 = scmp.eq.s32.totalorder %s19, 1
      %p121 = por %p119, %p120
      %p122 = scmp.ne.s32.totalorder %s113, %s114
      %p123 = scmp.eq.s32.totalorder %s19, 0
      %p124 = por %p122, %p123
      %p125 = scmp.ne.s32.totalorder %s113, %s114
      %p126 = scmp.eq.s32.totalorder %s20, 1
      %p127 = por %p125, %p126
      %p129 = scmp.ne.s32.totalorder %s114, %s128
      %p130 = scmp.eq.s32.totalorder %s20, 0
      %p131 = por %p129, %p130
      %s132 = ssub.s32 %s14, %s21
      %p133 = scmp.eq.s32.totalorder %s132, 0
      %s135 = sadd.s32 %s134, 1
      %s136 = scalar_select %p133, %s134, %s135
      %p139 = pneg %p133
      %p140 = scmp.eq.s32.totalorder %s14, 1
      %p141 = por %p139, %p140
      %p142 = scmp.ne.s32.totalorder %s134, %s137
      %p143 = scmp.eq.s32.totalorder %s14, 0
      %p144 = por %p142, %p143
      %p145 = scmp.ne.s32.totalorder %s134, %s137
      %p146 = scmp.eq.s32.totalorder %s19, 1
      %p147 = por %p145, %p146
      %p148 = scmp.ne.s32.totalorder %s137, %s138
      %p149 = scmp.eq.s32.totalorder %s19, 0
      %p150 = por %p148, %p149
      %p151 = scmp.ne.s32.totalorder %s137, %s138
      %p152 = scmp.eq.s32.totalorder %s20, 1
      %p153 = por %p151, %p152
      %p155 = scmp.ne.s32.totalorder %s138, %s154
      %p156 = scmp.eq.s32.totalorder %s20, 0
      %p157 = por %p155, %p156
      %p158 = scmp.le.s32.totalorder 1, %s14
      %p159 = scmp.lt.s32.totalorder %s14, 3
      %p160 = pnand %p158, %p159
      %p161 = pneg %p160
      // Predicated region
      $region9: #{embedding_patch_forward.3} parent=5 // pred_check
        _
      $region10: #{embedding_patch_forward.3} parent=5 // pred_check_branch
        %163 = sbr.rel (%p160) target = $region12
      $region11: #{embedding_patch_forward.3} parent=5 // pred_region
        %s164 = ssub.s32 %s14, 1
        // Predicated region
        $region13: #{embedding_patch_forward.3} parent=11 // pred_check
          %p165 = pneg %p61
        $region14: #{embedding_patch_forward.3} parent=11 // pred_check_branch
          %167 = sbr.rel (%p165) target = $region16
        $region15: #{embedding_patch_forward.3} parent=11 // pred_region
          _
        $region16: #{embedding_patch_forward.3} parent=11 // pred_fallthru
          _
        // Predicated region
        $region17: #{embedding_patch_forward.3} parent=11 // pred_check
          %p168 = pneg %p82
        $region18: #{embedding_patch_forward.3} parent=11 // pred_check_branch
          %170 = sbr.rel (%p168) target = $region20
        $region19: #{embedding_patch_forward.3} parent=11 // pred_region
          _
        $region20: #{embedding_patch_forward.3} parent=11 // pred_fallthru
          _
        // Predicated region
        $region21: #{embedding_patch_forward.3} parent=11 // pred_check
          %p171 = pneg %p103
        $region22: #{embedding_patch_forward.3} parent=11 // pred_check_branch
          %173 = sbr.rel (%p171) target = $region24
        $region23: #{embedding_patch_forward.3} parent=11 // pred_region
          _
        $region24: #{embedding_patch_forward.3} parent=11 // pred_fallthru
          _
        // Predicated region
        $region25: #{embedding_patch_forward.3} parent=11 // pred_check
          %p174 = pneg %p124
        $region26: #{embedding_patch_forward.3} parent=11 // pred_check_branch
          %176 = sbr.rel (%p174) target = $region28
        $region27: #{embedding_patch_forward.3} parent=11 // pred_region
          _
        $region28: #{embedding_patch_forward.3} parent=11 // pred_fallthru
          _
      $region12: #{embedding_patch_forward.3} parent=5 // pred_fallthru
        _
      %p177 = scmp.lt.s32.totalorder %s14, 2
      // Predicated region
      $region29: #{embedding_patch_forward.3} parent=5 // pred_check
        %p178 = pneg %p177
      $region30: #{embedding_patch_forward.3} parent=5 // pred_check_branch
        %180 = sbr.rel (%p178) target = $region32
      $region31: #{embedding_patch_forward.3} parent=5 // pred_region
        // Predicated region
        $region33: #{embedding_patch_forward.3} parent=31 // pred_check
          %p181 = pneg %p34
        $region34: #{embedding_patch_forward.3} parent=31 // pred_check_branch
          %183 = sbr.rel (%p181) target = $region36
        $region35: #{embedding_patch_forward.3} parent=31 // pred_region
          %s184 = smul.u32 2, %s14
          %p185 = scmp.lt.s32.totalorder %s184, 3
          %s186 = scalar_select %p185, %s184, 3
          %s187 = smul.addr %s186, 4
          %s188 = scalar_lea.vmem %s0, %s187
          %s189 = smul.u32 2, %s14
        $region36: #{embedding_patch_forward.3} parent=31 // pred_fallthru
          _
      $region32: #{embedding_patch_forward.3} parent=5 // pred_fallthru
        _
      %p190 = scmp.le.s32.totalorder 1, %s14
      %p191 = scmp.lt.s32.totalorder %s14, 3
      %p192 = pnand %p190, %p191
      %p193 = pneg %p192
      // Predicated region
      $region37: #{embedding_patch_forward.3} parent=5 // pred_check
        _
      $region38: #{embedding_patch_forward.3} parent=5 // pred_check_branch
        %195 = sbr.rel (%p192) target = $region40
      $region39: #{embedding_patch_forward.3} parent=5 // pred_region
        %s196 = ssub.s32 %s14, 1
        %s197 = smul.u32 2, %s19
        %p198 = scmp.lt.s32.totalorder %s197, 3
        %s199 = scalar_select %p198, %s197, 3
        %s200 = smul.addr %s199, 4
        %s201 = scalar_lea.vmem %s0, %s200
        %p202 = pneg %p40
        %p203 = pneg %p37
        %p204 = pneg %p61
        %p205 = pneg %p58
        %p206 = pneg %p82
        %p207 = pneg %p79
        %p208 = pneg %p103
        %p209 = pneg %p100
        %p210 = pneg %p124
        %p211 = pneg %p121
        %p212 = pneg %p150
        %p213 = pneg %p147
        %s214 = sand.u32 %s137, 1
        %s215 = scalar_lea.sflag [#allocation3], %s214
        %s216 = sand.u32 %s137, 1
        %s217 = smul.addr %s216, 16
        %s218 = scalar_lea.vmem [#allocation2], %s217
        %s219 = smul.u32 2, %s19
        %p220 = scmp.lt.s32.totalorder %s219, 3
        %s221 = scalar_select %p220, %s219, 3
        %s222 = smul.addr %s221, 4
        %s223 = scalar_lea.vmem %s0, %s222
        %s224 = smul.u32 2, %s19
        %s225 = smul.u32 2, %s19
        %v227 = vld [vmem:[%s223] sm:$0xf]
        %v228 = vld [vmem:[%s223 + $0x4] sm:$0xf]
        %v229 = vld [vmem:[%s1] sm:$0xf]
        %v230 = vld [vmem:[%s1 + $0x4] sm:$0xf]
        %v231 = vld [vmem:[%s1 + $0x8] sm:$0xf]
        %v232 = vld [vmem:[%s1 + $0xc] sm:$0xf]
        %v233 = vld [vmem:[%s1 + $0x10] sm:$0xf]
        %v234 = vld [vmem:[%s1 + $0x14] sm:$0xf]
        %v235 = vld [vmem:[%s2] sm:$0x1]
        %v237 = vlaneseq
        %v238 = vshrl.u32 %v237, 7
        %v239 = vsub.s32 0, %v238
        %v240 = vrot.slane %v235, %v239
        %v244 = vunpack.c.l.b16 %v227
        %v245 = vunpack.c.l.b16 %v228
        %v246 = vpack.c.b16 %v245, %v244
        %v253 = vunpack.c.l.b16 %v229
        %v254 = vunpack.c.l.b16 %v230
        %v255 = vunpack.c.l.b16 %v231
        %v256 = vunpack.c.l.b16 %v232
        %v257 = vunpack.c.l.b16 %v233
        %v258 = vunpack.c.l.b16 %v234
        %v259 = vpack.c.b16 %v254, %v253
        %v260 = vpack.c.b16 %v256, %v255
        %v261 = vpack.c.b16 %v258, %v257
        %vm265 = vcmask 392192
        %v267 = vsel %vm265, %v246, 0
        %269 = vmatprep.subr.bf16.mxu0 0
        %270 = vmatpush1.bf16.msra.mxu0 0
        %271 = vmatprep.subr.bf16.mxu0 0
        %272 = vmatpush1.bf16.msra.mxu0 0
        %273 = vmatprep.subr.bf16.mxu0 0
        %274 = vmatpush1.bf16.msra.mxu0 0
        %275 = vmatprep.subr.bf16.mxu0 0
        %276 = vmatpush1.bf16.msra.mxu0 0
        %277 = vmatprep.subr.bf16.mxu0 0
        %278 = vmatpush1.bf16.msra.mxu0 0
        %279 = vmatprep.subr.bf16.mxu0 0
        %280 = vmatpush1.bf16.msra.mxu0 %v261
        %281 = vmatprep.subr.bf16.mxu0 0
        %282 = vmatpush1.bf16.msra.mxu0 %v260
        %283 = vmatprep.subr.bf16.mxu0 0
        %284 = vmatpush1.bf16.msra.mxu0 %v259
        %285 = vmatprep.subr.bf16.mxu0 0
        %286 = vmatpush2.bf16.msra.mxu0 0
        %287 = vmatprep.subr.bf16.mxu0 0
        %288 = vmatpush2.bf16.msra.mxu0 0
        %289 = vmatprep.subr.bf16.mxu0 0
        %290 = vmatpush2.bf16.msra.mxu0 0
        %291 = vmatprep.subr.bf16.mxu0 0
        %292 = vmatpush2.bf16.msra.mxu0 0
        %293 = vmatprep.subr.bf16.mxu0 0
        %294 = vmatpush2.bf16.msra.mxu0 0
        %295 = vmatprep.subr.bf16.mxu0 0
        %296 = vmatpush2.bf16.msra.mxu0 0
        %297 = vmatprep.subr.bf16.mxu0 0
        %298 = vmatpush2.bf16.msra.mxu0 0
        %299 = vmatprep.subr.bf16.mxu0 0
        %300 = vmatpush2.bf16.msra.mxu0 0
        %301 = vmatprep.mubr.bf16.mxu0 0
        %302 = vmatmul.mubr.bf16.gmra.mxu0 %v267
        %v303 = vpop.f32.mrf.mxu0
        %v304 = vadd.f32 %v240, %v303
        %v305 = vpop.f32.mrf.mxu0
        %v306 = vpop.f32.mrf.mxu0
        %v307 = vadd.f32 %v240, %v306
        %v308 = vpop.f32.mrf.mxu0
        %309 = vdwg.mxu0
        %v310 = vmul.f32 %v304, 0.5
        %v311 = vmul.f32 %v307, 0.5
        %v312 = vmul.f32 %v304, 0.70710677
        %v313 = vmul.f32 %v307, 0.70710677
        %v314 = verf.f32.pop %v312
        %v315 = verf.f32.pop %v313
        %v316 = vadd.f32 %v314, 1.0
        %v317 = vadd.f32 %v315, 1.0
        %v318 = vmul.f32 %v310, %v316
        %v319 = vmul.f32 %v311, %v317
        %v320 = vld [vmem:[%s3] sm:$0x1]
        %v322 = vlaneseq
        %v323 = vshrl.u32 %v322, 7
        %v324 = vsub.s32 0, %v323
        %v325 = vrot.slane %v320, %v324
        %v327 = vmul.f32 %v318, %v325
        %v328 = vmul.f32 %v319, %v325
        %v329 = vld [vmem:[%s4] sm:$0x1]
        %v331 = vlaneseq
        %v332 = vshrl.u32 %v331, 7
        %v333 = vsub.s32 0, %v332
        %v334 = vrot.slane %v329, %v333
        %v336 = vadd.f32 %v327, %v334
        %v337 = vadd.f32 %v328, %v334
        %vm338 = vcmask 261120
        %339 = vst.msk [vmem:[%s218] sm:$0xff] %vm338, %v336
        %340 = vst.msk [vmem:[%s218 + $0x8] sm:$0xff] %vm338, %v337
        %s341 = sand.u32 %s137, 1
        %s342 = scalar_lea.sflag [#allocation3], %s341
        %s343 = sand.u32 %s137, 1
        %s344 = smul.addr %s343, 16
        %s345 = scalar_lea.vmem [#allocation2], %s344
        // Predicated region
        $region41: #{embedding_patch_forward.3} parent=39 // pred_check
          %p346 = pneg %p147
        $region42: #{embedding_patch_forward.3} parent=39 // pred_check_branch
          %348 = sbr.rel (%p346) target = $region44
        $region43: #{embedding_patch_forward.3} parent=39 // pred_region
          %s349 = smul.u32 2, %s19
          %s351 = ssub.s32 256, 256
          %352 = vsyncadd %s342, %s351
          %s353 = smul.addr %s349, 128
          %s354 = scalar_lea.hbm %s5, %s353
          %s355 = sshll.u32 %s345, 4
          %s356 = int_to_ptr.vmem [resolvable:$true] %s355
          %361 = dma.vmem_to_hbm [thread:$0]  %s356, 256, %s354, %s342, 128, 128, 8
        $region44: #{embedding_patch_forward.3} parent=39 // pred_fallthru
          _
      $region40: #{embedding_patch_forward.3} parent=5 // pred_fallthru
        _
      %p362 = scmp.le.s32.totalorder 2, %s14
      // Predicated region
      $region45: #{embedding_patch_forward.3} parent=5 // pred_check
        %p363 = pneg %p362
      $region46: #{embedding_patch_forward.3} parent=5 // pred_check_branch
        %365 = sbr.rel (%p363) target = $region48
      $region47: #{embedding_patch_forward.3} parent=5 // pred_region
        %s366 = ssub.s32 %s14, 2
        // Predicated region
        $region49: #{embedding_patch_forward.3} parent=47 // pred_check
          %p367 = pneg %p153
        $region50: #{embedding_patch_forward.3} parent=47 // pred_check_branch
          %369 = sbr.rel (%p367) target = $region52
        $region51: #{embedding_patch_forward.3} parent=47 // pred_region
          %s370 = sand.u32 %s138, 1
          %s371 = scalar_lea.sflag [#allocation3], %s370
          %s372 = sand.u32 %s138, 1
          %s373 = smul.addr %s372, 16
          %s374 = scalar_lea.vmem [#allocation2], %s373
          %375 = dma.done %s371, 256
        $region52: #{embedding_patch_forward.3} parent=47 // pred_fallthru
          _
      $region48: #{embedding_patch_forward.3} parent=5 // pred_fallthru
        _
    $region6: #{embedding_patch_forward.3} parent=1 // loop_footer
      %s18 = sadd.s32 1, %s14
    $region7: #{embedding_patch_forward.3} parent=1 // loop_footer_branch
      %13 = sbr.rel target = $region3
    $region8: #{embedding_patch_forward.3} parent=1 // loop_exit
      _
    %376 = vsyncpa [#allocation3], 1
    %s377 = scalar_lea.sflag [#allocation3], 1
    %378 = vsyncpa %s377, 1

</llo_original>
